<compile_context>
chip_gen: v7x
topology: tpu7x:2x2x1
jax: 0.10.0
libtpu: 0.0.40
codegen_flags: <defaults>
</compile_context>

<pallas_src>
import jax
import jax.numpy as jnp
from jax import lax
from jax.experimental import pallas as pl
from jax.experimental.pallas import tpu as pltpu

# Module hyper-parameters (from the PyTorch script)
K = 3
D = 60
SEGMENT_COUNT = D // K                               # 20
HIDDEN_DIM_SEGMENT = 3
FEAT = 4 * K                                         # 12 features per segment
INPUT_DIM = SEGMENT_COUNT * FEAT                     # 240
HIDDEN_TOTAL = SEGMENT_COUNT * HIDDEN_DIM_SEGMENT    # 60
HIDDEN_PAD = 128                                     # lane-dense padded hidden width

DEFAULT_BLOCK_ROWS = 1024                            # row tile for large B


def _dna_ae_kernel(x_ref, we_ref, be_ref, wd_ref, bd_ref, o_ref):
    # x_ref : (TB, 240)      we_ref : (240, 128)   be_ref : (1, 128)
    # wd_ref: (128, 240)     bd_ref : (1, 240)     o_ref  : (TB, 240)
    x = x_ref[...]

    # encoder (block-diagonal, hidden zero-padded to 128): linear + exact (erf) GELU
    h = jnp.dot(x, we_ref[...], preferred_element_type=jnp.float32) + be_ref[...]
    inv_sqrt2 = jnp.float32(0.7071067811865476)
    h = 0.5 * h * (1.0 + lax.erf(h * inv_sqrt2))

    # decoder (block-diagonal): linear + sigmoid
    d = jnp.dot(h, wd_ref[...], preferred_element_type=jnp.float32) + bd_ref[...]
    o_ref[...] = jax.nn.sigmoid(d).astype(o_ref.dtype)


def _block_diag(blocks):
    """(S, a, b) stacked blocks -> (S*a, S*b) block-diagonal matrix (exact zeros off-diag)."""
    S, a, b = blocks.shape
    eye = jnp.eye(S, dtype=blocks.dtype)
    return jnp.einsum("sij,st->sitj", blocks, eye).reshape(S * a, S * b)


def fold_dna_params(we, be, wd, bd):
    """Fold the 20 per-segment Linear layers into block-diagonal, lane-padded weights.

    Call ONCE at parameter-creation time (hoisted out of the per-call hot path).
    we: (S, FEAT, H), be: (S, H), wd: (S, H, FEAT), bd: (S, FEAT).
    Returns w_enc (240,128), b_enc (1,128), w_dec (128,240), b_dec (1,240)."""
    S, F, H = SEGMENT_COUNT, FEAT, HIDDEN_DIM_SEGMENT
    w_enc = _block_diag(we)                          # (240, 60)
    w_dec = _block_diag(wd)                          # (60, 240)
    b_enc = be.reshape(1, S * H)                     # (1, 60)
    b_dec = bd.reshape(1, S * F)                     # (1, 240)

    pad_h = HIDDEN_PAD - S * H                       # 68 zero columns/rows
    w_enc = jnp.pad(w_enc, ((0, 0), (0, pad_h)))     # (240, 128)
    b_enc = jnp.pad(b_enc, ((0, 0), (0, pad_h)))     # (1, 128)
    w_dec = jnp.pad(w_dec, ((0, pad_h), (0, 0)))     # (128, 240)
    return w_enc, b_enc, w_dec, b_dec


def _round_up(n, m):
    return ((n + m - 1) // m) * m


def dna_autoencoder_forward(x, w_enc, b_enc, w_dec, b_dec, *,
                            block_rows=DEFAULT_BLOCK_ROWS):
    """x: (B, 240) f32; folded/padded params from fold_dna_params. Returns (B, 240) f32."""
    B = x.shape[0]

    # Row tile: sublane-aligned (multiple of 8); full padded batch for small B.
    tb = block_rows if B > block_rows else max(8, _round_up(B, 8))
    padded_b = _round_up(B, tb)
    x_in = x if padded_b == B else jnp.pad(x, ((0, padded_b - B), (0, 0)))
    n_blocks = padded_b // tb

    flops = 2 * 2 * padded_b * INPUT_DIM * HIDDEN_PAD
    transcendentals = padded_b * (HIDDEN_PAD + INPUT_DIM)      # erf + sigmoid
    bytes_accessed = 4 * (
        2 * padded_b * INPUT_DIM                               # x in, out
        + 2 * INPUT_DIM * HIDDEN_PAD                           # W_enc, W_dec
        + HIDDEN_PAD + INPUT_DIM                               # biases
    )

    out = pl.pallas_call(
        _dna_ae_kernel,
        out_shape=jax.ShapeDtypeStruct((padded_b, INPUT_DIM), jnp.float32),
        grid=(n_blocks,),
        in_specs=[
            pl.BlockSpec((tb, INPUT_DIM), lambda i: (i, 0)),           # x row tile
            pl.BlockSpec((INPUT_DIM, HIDDEN_PAD), lambda i: (0, 0)),   # W_enc (resident)
            pl.BlockSpec((1, HIDDEN_PAD), lambda i: (0, 0)),           # b_enc (resident)
            pl.BlockSpec((HIDDEN_PAD, INPUT_DIM), lambda i: (0, 0)),   # W_dec (resident)
            pl.BlockSpec((1, INPUT_DIM), lambda i: (0, 0)),            # b_dec (resident)
        ],
        out_specs=pl.BlockSpec((tb, INPUT_DIM), lambda i: (i, 0)),
        compiler_params=pltpu.CompilerParams(
            # Megacore: shard row tiles across both TCs on v7x (no-op on v5e/v6e).
            dimension_semantics=("parallel",),
            # ~4 MB of double-buffered tiles + ~0.5 MB weights at TB=1024; 32 MiB
            # leaves headroom and is safe on v5e (128 MiB), v6e (128), v7x (64).
            vmem_limit_bytes=32 * 1024 * 1024,
        ),
        cost_estimate=pl.CostEstimate(
            flops=flops,
            transcendentals=transcendentals,
            bytes_accessed=bytes_accessed,
        ),
    )(x_in, w_enc, b_enc, w_dec, b_dec)

    return out if padded_b == B else out[:B]


def _reference_forward(x, we, be, wd, bd):
    """Pure-JAX reference matching the PyTorch module (per-segment loop)."""
    B = x.shape[0]
    seg = x.reshape(B, SEGMENT_COUNT, FEAT)
    outs = []
    for i in range(SEGMENT_COUNT):
        h = seg[:, i, :] @ we[i] + be[i]
        h = 0.5 * h * (1.0 + lax.erf(h / jnp.sqrt(2.0)))
        d = jax.nn.sigmoid(h @ wd[i] + bd[i])
        outs.append(d)
    return jnp.concatenate(outs, axis=1)


def _init_params(key):
    """Deterministic per-segment Linear params (PyTorch-style uniform fan-in init)."""
    k_we, k_be, k_wd, k_bd = jax.random.split(key, 4)
    bound_e = 1.0 / jnp.sqrt(jnp.float32(FEAT))
    bound_d = 1.0 / jnp.sqrt(jnp.float32(HIDDEN_DIM_SEGMENT))
    we = jax.random.uniform(k_we, (SEGMENT_COUNT, FEAT, HIDDEN_DIM_SEGMENT),
                            jnp.float32, -bound_e, bound_e)
    be = jax.random.uniform(k_be, (SEGMENT_COUNT, HIDDEN_DIM_SEGMENT),
                            jnp.float32, -bound_e, bound_e)
    wd = jax.random.uniform(k_wd, (SEGMENT_COUNT, HIDDEN_DIM_SEGMENT, FEAT),
                            jnp.float32, -bound_d, bound_d)
    bd = jax.random.uniform(k_bd, (SEGMENT_COUNT, FEAT),
                            jnp.float32, -bound_d, bound_d)
    return we, be, wd, bd


if __name__ == "__main__":
    key = jax.random.PRNGKey(0)
    k_x, k_x2, k_p = jax.random.split(key, 3)

    we, be, wd, bd = _init_params(k_p)
    # Fold + pad the 20 per-segment layers ONCE (outside the per-call path).
    w_enc, b_enc, w_dec, b_dec = fold_dna_params(we, be, wd, bd)
    w_enc, b_enc, w_dec, b_dec = jax.block_until_ready((w_enc, b_enc, w_dec, b_dec))

    # --- small batch: single grid step ---
    B = 8
    x = jax.random.uniform(k_x, (B, INPUT_DIM), jnp.float32)
    fwd = jax.jit(dna_autoencoder_forward)
    out = jax.block_until_ready(fwd(x, w_enc, b_enc, w_dec, b_dec))
    ref = _reference_forward(x, we, be, wd, bd)
    assert out.shape == (B, INPUT_DIM)
    assert jnp.allclose(out, ref, atol=1e-5, rtol=1e-5), "mismatch vs reference (B=8)"

    # --- ragged batch with a multi-step row grid (exercises tiling + padding path) ---
    B2 = 40
    x2 = jax.random.uniform(k_x2, (B2, INPUT_DIM), jnp.float32)
    fwd_tiled = jax.jit(lambda *a: dna_autoencoder_forward(*a, block_rows=16))
    out2 = jax.block_until_ready(fwd_tiled(x2, w_enc, b_enc, w_dec, b_dec))
    ref2 = _reference_forward(x2, we, be, wd, bd)
    assert out2.shape == (B2, INPUT_DIM)
    assert jnp.allclose(out2, ref2, atol=1e-5, rtol=1e-5), "mismatch vs reference (B=40)"

    print("KERNEL_OK")
</pallas_src>

<mosaic_0001>
module attributes {stable_mosaic.version = 11 : i64} {
  func.func @_dna_ae_kernel(%arg0: i32, %arg1: memref<8x240xf32, #tpu.memory_space<vmem>>, %arg2: memref<240x128xf32, #tpu.memory_space<vmem>>, %arg3: memref<1x128xf32, #tpu.memory_space<vmem>>, %arg4: memref<128x240xf32, #tpu.memory_space<vmem>>, %arg5: memref<1x240xf32, #tpu.memory_space<vmem>>, %arg6: memref<8x240xf32, #tpu.memory_space<vmem>>) attributes {dimension_semantics = [#tpu.dimension_semantics<parallel>], iteration_bounds = array<i64: 1>, scalar_prefetch = 0 : i64, scratch_operands = 0 : i64, tpu.core_type = #tpu.core_type<tc>, window_params = [{transform_indices = @transform_0, window_bounds = array<i64: 8, 240>}, {pipeline_mode = #tpu.pipeline_mode<synchronous>, transform_indices = @transform_1, window_bounds = array<i64: 240, 128>}, {pipeline_mode = #tpu.pipeline_mode<synchronous>, transform_indices = @transform_2, window_bounds = array<i64: 1, 128>}, {pipeline_mode = #tpu.pipeline_mode<synchronous>, transform_indices = @transform_3, window_bounds = array<i64: 128, 240>}, {pipeline_mode = #tpu.pipeline_mode<synchronous>, transform_indices = @transform_4, window_bounds = array<i64: 1, 240>}, {transform_indices = @transform_5, window_bounds = array<i64: 8, 240>}]} {
    %c0 = arith.constant 0 : index
    %c0_0 = arith.constant 0 : index
    %0 = vector.load %arg1[%c0, %c0_0] : memref<8x240xf32, #tpu.memory_space<vmem>>, vector<8x240xf32>
    %c0_1 = arith.constant 0 : index
    %c0_2 = arith.constant 0 : index
    %1 = vector.load %arg2[%c0_1, %c0_2] : memref<240x128xf32, #tpu.memory_space<vmem>>, vector<240x128xf32>
    %cst = arith.constant dense<0.000000e+00> : vector<8x128xf32>
    %2 = tpu.matmul %0, %1, %cst {dimension_numbers = #tpu.dot_dimension_numbers<[1], [0], [0], [1], [0, 0, 1, 1], [], []>} : vector<8x240xf32>, vector<240x128xf32>, vector<8x128xf32> -> vector<8x128xf32>
    %c0_3 = arith.constant 0 : index
    %c0_4 = arith.constant 0 : index
    %3 = vector.load %arg3[%c0_3, %c0_4] : memref<1x128xf32, #tpu.memory_space<vmem>>, vector<1x128xf32>
    %4 = vector.broadcast %3 : vector<1x128xf32> to vector<8x128xf32>
    %5 = arith.addf %2, %4 : vector<8x128xf32>
    %cst_5 = arith.constant 5.000000e-01 : f32
    %6 = vector.broadcast %cst_5 : f32 to vector<8x128xf32>
    %7 = arith.mulf %6, %5 : vector<8x128xf32>
    %cst_6 = arith.constant 0.707106769 : f32
    %8 = vector.broadcast %cst_6 : f32 to vector<8x128xf32>
    %9 = arith.mulf %5, %8 : vector<8x128xf32>
    %10 = math.erf %9 : vector<8x128xf32>
    %cst_7 = arith.constant 1.000000e+00 : f32
    %11 = vector.broadcast %cst_7 : f32 to vector<8x128xf32>
    %12 = arith.addf %11, %10 : vector<8x128xf32>
    %13 = arith.mulf %7, %12 : vector<8x128xf32>
    %c0_8 = arith.constant 0 : index
    %c0_9 = arith.constant 0 : index
    %14 = vector.load %arg4[%c0_8, %c0_9] : memref<128x240xf32, #tpu.memory_space<vmem>>, vector<128x240xf32>
    %cst_10 = arith.constant dense<0.000000e+00> : vector<8x240xf32>
    %15 = tpu.matmul %13, %14, %cst_10 {dimension_numbers = #tpu.dot_dimension_numbers<[1], [0], [0], [1], [0, 0, 1, 1], [], []>} : vector<8x128xf32>, vector<128x240xf32>, vector<8x240xf32> -> vector<8x240xf32>
    %c0_11 = arith.constant 0 : index
    %c0_12 = arith.constant 0 : index
    %16 = vector.load %arg5[%c0_11, %c0_12] : memref<1x240xf32, #tpu.memory_space<vmem>>, vector<1x240xf32>
    %17 = vector.broadcast %16 : vector<1x240xf32> to vector<8x240xf32>
    %18 = arith.addf %15, %17 : vector<8x240xf32>
    %19 = arith.negf %18 : vector<8x240xf32>
    %20 = math.exp %19 : vector<8x240xf32>
    %cst_13 = arith.constant 1.000000e+00 : f32
    %21 = vector.broadcast %cst_13 : f32 to vector<8x240xf32>
    %22 = arith.addf %21, %20 : vector<8x240xf32>
    %23 = arith.divf %21, %22 : vector<8x240xf32>
    %c0_14 = arith.constant 0 : index
    %c0_15 = arith.constant 0 : index
    %24 = vector.load %arg6[%c0_14, %c0_15] : memref<8x240xf32, #tpu.memory_space<vmem>>, vector<8x240xf32>
    tpu.vector_store %arg6[%c0_14, %c0_15], %23 {strides = array<i32>} : memref<8x240xf32, #tpu.memory_space<vmem>>, vector<8x240xf32>,
    return
  }
  func.func @transform_0(%arg0: i32) -> (i32, i32) {
    %c0_i32 = arith.constant 0 : i32
    %c0_i32_0 = arith.constant 0 : i32
    return %arg0, %c0_i32 : i32, i32
  }
  func.func @transform_1(%arg0: i32) -> (i32, i32) {
    %c0_i32 = arith.constant 0 : i32
    %c0_i32_0 = arith.constant 0 : i32
    %c0_i32_1 = arith.constant 0 : i32
    return %c0_i32, %c0_i32_0 : i32, i32
  }
  func.func @transform_2(%arg0: i32) -> (i32, i32) {
    %c0_i32 = arith.constant 0 : i32
    %c0_i32_0 = arith.constant 0 : i32
    %c0_i32_1 = arith.constant 0 : i32
    return %c0_i32, %c0_i32_0 : i32, i32
  }
  func.func @transform_3(%arg0: i32) -> (i32, i32) {
    %c0_i32 = arith.constant 0 : i32
    %c0_i32_0 = arith.constant 0 : i32
    %c0_i32_1 = arith.constant 0 : i32
    return %c0_i32, %c0_i32_0 : i32, i32
  }
  func.func @transform_4(%arg0: i32) -> (i32, i32) {
    %c0_i32 = arith.constant 0 : i32
    %c0_i32_0 = arith.constant 0 : i32
    %c0_i32_1 = arith.constant 0 : i32
    return %c0_i32, %c0_i32_0 : i32, i32
  }
  func.func @transform_5(%arg0: i32) -> (i32, i32) {
    %c0_i32 = arith.constant 0 : i32
    %c0_i32_0 = arith.constant 0 : i32
    return %arg0, %c0_i32 : i32, i32
  }
}

</mosaic_0001>

<llo_original>
// kernel: dna_autoencoder_forward.1
$region0: #{dna_autoencoder_forward.1}
  #allocation0 [shape = 'u32[]', space=smem, size = 0x4, offset = 0x4, fixed_abs, tag = 'smem constant byte address 0x4 - core index']
  #allocation1 [shape = 'u32[144,128]{1,0:T(1,128)}', space=vmem, size = 0x12000, scoped, tag = 'internal scratch']
  %s0 = inlined_call_operand.vmem [shape: f32[8,240], index: 0, kind: input, shape index: {}]
  %s1 = inlined_call_operand.vmem [shape: f32[240,128], index: 1, kind: input, shape index: {}]
  %s2 = inlined_call_operand.vmem [shape: f32[1,128], index: 2, kind: input, shape index: {}]
  %s3 = inlined_call_operand.vmem [shape: f32[128,240], index: 3, kind: input, shape index: {}]
  %s4 = inlined_call_operand.vmem [shape: f32[1,240], index: 4, kind: input, shape index: {}]
  %s5 = inlined_call_operand.hbm [shape: f32[8,240], index: 5, kind: output, shape index: {}]
  %s6 = sld [smem:[#allocation0]]
  $region30: #{dna_autoencoder_forward.1} parent=0
    _
  %s8 = ssub.s32 1, %s6
  %s9 = scalar_select 0, %s8, %s6
  $region1: #{dna_autoencoder_forward.1} parent=0
    #allocation2 [shape = 'u8[8192]{0}', space=vmem, size = 0x2000, scoped, tag = 'output window, operand 0, single buffered']
    #allocation3 [shape = 's32[1]{0}', space=sflag, size = 0x4, scoped, tag = 'scoped memory for dna_autoencoder_forward.1']
    %10 = vsyncpa [#allocation3], 0
    // Predicated region
    $region2: #{dna_autoencoder_forward.1} parent=1 // pred_check
      _
    $region3: #{dna_autoencoder_forward.1} parent=1 // pred_check_branch
      %12 = sbr.rel (0) target = $region5
    $region4: #{dna_autoencoder_forward.1} parent=1 // pred_region
      _
    $region5: #{dna_autoencoder_forward.1} parent=1 // pred_fallthru
      _
    // Predicated region
    $region6: #{dna_autoencoder_forward.1} parent=1 // pred_check
      _
    $region7: #{dna_autoencoder_forward.1} parent=1 // pred_check_branch
      %14 = sbr.rel (0) target = $region9
    $region8: #{dna_autoencoder_forward.1} parent=1 // pred_region
      _
    $region9: #{dna_autoencoder_forward.1} parent=1 // pred_fallthru
      _
    // Predicated region
    $region10: #{dna_autoencoder_forward.1} parent=1 // pred_check
      _
    $region11: #{dna_autoencoder_forward.1} parent=1 // pred_check_branch
      %16 = sbr.rel (0) target = $region13
    $region12: #{dna_autoencoder_forward.1} parent=1 // pred_region
      _
    $region13: #{dna_autoencoder_forward.1} parent=1 // pred_fallthru
      _
    // Predicated region
    $region14: #{dna_autoencoder_forward.1} parent=1 // pred_check
      _
    $region15: #{dna_autoencoder_forward.1} parent=1 // pred_check_branch
      %18 = sbr.rel (0) target = $region17
    $region16: #{dna_autoencoder_forward.1} parent=1 // pred_region
      _
    $region17: #{dna_autoencoder_forward.1} parent=1 // pred_fallthru
      _
    // Predicated region
    $region18: #{dna_autoencoder_forward.1} parent=1 // pred_check
      _
    $region19: #{dna_autoencoder_forward.1} parent=1 // pred_check_branch
      %20 = sbr.rel (0) target = $region21
    $region20: #{dna_autoencoder_forward.1} parent=1 // pred_region
      _
    $region21: #{dna_autoencoder_forward.1} parent=1 // pred_fallthru
      _
    %v21 = vld [vmem:[%s0] sm:$0xff]
    %v22 = vld [vmem:[%s0 + $0x8] sm:$0xff]
    %v23 = vld [vmem:[%s1] sm:$0xff]
    %v24 = vld [vmem:[%s1 + $0x8] sm:$0xff]
    %v25 = vld [vmem:[%s1 + $0x10] sm:$0xff]
    %v26 = vld [vmem:[%s1 + $0x18] sm:$0xff]
    %v27 = vld [vmem:[%s1 + $0x20] sm:$0xff]
    %v28 = vld [vmem:[%s1 + $0x28] sm:$0xff]
    %v29 = vld [vmem:[%s1 + $0x30] sm:$0xff]
    %v30 = vld [vmem:[%s1 + $0x38] sm:$0xff]
    %v31 = vld [vmem:[%s1 + $0x40] sm:$0xff]
    %v32 = vld [vmem:[%s1 + $0x48] sm:$0xff]
    %v33 = vld [vmem:[%s1 + $0x50] sm:$0xff]
    %v34 = vld [vmem:[%s1 + $0x58] sm:$0xff]
    %v35 = vld [vmem:[%s1 + $0x60] sm:$0xff]
    %v36 = vld [vmem:[%s1 + $0x68] sm:$0xff]
    %v37 = vld [vmem:[%s1 + $0x70] sm:$0xff]
    %v38 = vld [vmem:[%s1 + $0x78] sm:$0xff]
    %v39 = vld [vmem:[%s1 + $0x80] sm:$0xff]
    %v40 = vld [vmem:[%s1 + $0x88] sm:$0xff]
    %v41 = vld [vmem:[%s1 + $0x90] sm:$0xff]
    %v42 = vld [vmem:[%s1 + $0x98] sm:$0xff]
    %v43 = vld [vmem:[%s1 + $0xa0] sm:$0xff]
    %v44 = vld [vmem:[%s1 + $0xa8] sm:$0xff]
    %v45 = vld [vmem:[%s1 + $0xb0] sm:$0xff]
    %v46 = vld [vmem:[%s1 + $0xb8] sm:$0xff]
    %v47 = vld [vmem:[%s1 + $0xc0] sm:$0xff]
    %v48 = vld [vmem:[%s1 + $0xc8] sm:$0xff]
    %v49 = vld [vmem:[%s1 + $0xd0] sm:$0xff]
    %v50 = vld [vmem:[%s1 + $0xd8] sm:$0xff]
    %v51 = vld [vmem:[%s1 + $0xe0] sm:$0xff]
    %v52 = vld [vmem:[%s1 + $0xe8] sm:$0xff]
    %v53 = vld [vmem:[%s2] sm:$0x1]
    %v55 = vlaneseq
    %v56 = vshrl.u32 %v55, 7
    %v57 = vsub.s32 0, %v56
    %v58 = vrot.slane %v53, %v57
    %vm60 = vcmask 916480
    %v62 = vsel %vm60, %v22, 0
    %64 = vmatprep.subr.mxu0 0.0
    %65 = vmatpush1.msra.mxu0 %v23
    %66 = vmatprep.subr.mxu0 0.0
    %67 = vmatpush1.msra.mxu0 %v24
    %68 = vmatprep.subr.mxu0 0.0
    %69 = vmatpush1.msra.mxu0 %v25
    %70 = vmatprep.subr.mxu0 0.0
    %71 = vmatpush1.msra.mxu0 %v26
    %72 = vmatprep.subr.mxu0 0.0
    %73 = vmatpush1.msra.mxu0 %v27
    %74 = vmatprep.subr.mxu0 0.0
    %75 = vmatpush1.msra.mxu0 %v28
    %76 = vmatprep.subr.mxu0 0.0
    %77 = vmatpush1.msra.mxu0 %v29
    %78 = vmatprep.subr.mxu0 0.0
    %79 = vmatpush1.msra.mxu0 %v30
    %80 = vmatprep.subr.mxu0 0.0
    %81 = vmatpush1.msra.mxu0 %v31
    %82 = vmatprep.subr.mxu0 0.0
    %83 = vmatpush1.msra.mxu0 %v32
    %84 = vmatprep.subr.mxu0 0.0
    %85 = vmatpush1.msra.mxu0 %v33
    %86 = vmatprep.subr.mxu0 0.0
    %87 = vmatpush1.msra.mxu0 %v34
    %88 = vmatprep.subr.mxu0 0.0
    %89 = vmatpush1.msra.mxu0 %v35
    %90 = vmatprep.subr.mxu0 0.0
    %91 = vmatpush1.msra.mxu0 %v36
    %92 = vmatprep.subr.mxu0 0.0
    %93 = vmatpush1.msra.mxu0 %v37
    %94 = vmatprep.subr.mxu0 0.0
    %95 = vmatpush1.msra.mxu0 %v38
    %96 = vmatprep.subr.mxu0 0.0
    %97 = vmatpush1.msra.mxu0 %v39
    %98 = vmatprep.subr.mxu0 0.0
    %99 = vmatpush1.msra.mxu0 %v40
    %100 = vmatprep.subr.mxu0 0.0
    %101 = vmatpush1.msra.mxu0 %v41
    %102 = vmatprep.subr.mxu0 0.0
    %103 = vmatpush1.msra.mxu0 %v42
    %104 = vmatprep.subr.mxu0 0.0
    %105 = vmatpush1.msra.mxu0 %v43
    %106 = vmatprep.subr.mxu0 0.0
    %107 = vmatpush1.msra.mxu0 %v44
    %108 = vmatprep.subr.mxu0 0.0
    %109 = vmatpush1.msra.mxu0 %v45
    %110 = vmatprep.subr.mxu0 0.0
    %111 = vmatpush1.msra.mxu0 %v46
    %112 = vmatprep.subr.mxu0 0.0
    %113 = vmatpush1.msra.mxu0 %v47
    %114 = vmatprep.subr.mxu0 0.0
    %115 = vmatpush1.msra.mxu0 %v48
    %116 = vmatprep.subr.mxu0 0.0
    %117 = vmatpush1.msra.mxu0 %v49
    %118 = vmatprep.subr.mxu0 0.0
    %119 = vmatpush1.msra.mxu0 %v50
    %120 = vmatprep.subr.mxu0 0.0
    %121 = vmatpush1.msra.mxu0 %v51
    %122 = vmatprep.subr.mxu0 0.0
    %123 = vmatpush1.msra.mxu0 %v52
    %124 = vmatprep.subr.mxu0 0.0
    %125 = vmatpush1.msra.mxu0 0.0
    %126 = vmatprep.subr.mxu0 0.0
    %127 = vmatpush1.msra.mxu0 0.0
    %128 = vmatprep.mubr.f32.mxu0 %v62
    %129 = vmatmul.mubr.f32.gmra.mrb[0].mxu0 %v21
    %v130 = vpop.f32.mrb[0].mxu0
    %v131 = vadd.f32 %v58, %v130
    %v132 = vpop.f32.mrb[0].mxu0
    %133 = vdwg.mxu0
    %v134 = vmul.f32 %v131, 0.5
    %v135 = vmul.f32 %v131, 0.70710677
    %v136 = verf.f32.pop %v135
    %v137 = vadd.f32 %v136, 1.0
    %v138 = vmul.f32 %v134, %v137
    %v139 = vld [vmem:[%s3] sm:$0xff]
    %v140 = vld [vmem:[%s3 + $0x8] sm:$0xff]
    %v141 = vld [vmem:[%s3 + $0x10] sm:$0xff]
    %v142 = vld [vmem:[%s3 + $0x18] sm:$0xff]
    %v143 = vld [vmem:[%s3 + $0x20] sm:$0xff]
    %v144 = vld [vmem:[%s3 + $0x28] sm:$0xff]
    %v145 = vld [vmem:[%s3 + $0x30] sm:$0xff]
    %v146 = vld [vmem:[%s3 + $0x38] sm:$0xff]
    %v147 = vld [vmem:[%s3 + $0x40] sm:$0xff]
    %v148 = vld [vmem:[%s3 + $0x48] sm:$0xff]
    %v149 = vld [vmem:[%s3 + $0x50] sm:$0xff]
    %v150 = vld [vmem:[%s3 + $0x58] sm:$0xff]
    %v151 = vld [vmem:[%s3 + $0x60] sm:$0xff]
    %v152 = vld [vmem:[%s3 + $0x68] sm:$0xff]
    %v153 = vld [vmem:[%s3 + $0x70] sm:$0xff]
    %v154 = vld [vmem:[%s3 + $0x78] sm:$0xff]
    %v155 = vld [vmem:[%s3 + $0x80] sm:$0xff]
    %v156 = vld [vmem:[%s3 + $0x88] sm:$0xff]
    %v157 = vld [vmem:[%s3 + $0x90] sm:$0xff]
    %v158 = vld [vmem:[%s3 + $0x98] sm:$0xff]
    %v159 = vld [vmem:[%s3 + $0xa0] sm:$0xff]
    %v160 = vld [vmem:[%s3 + $0xa8] sm:$0xff]
    %v161 = vld [vmem:[%s3 + $0xb0] sm:$0xff]
    %v162 = vld [vmem:[%s3 + $0xb8] sm:$0xff]
    %v163 = vld [vmem:[%s3 + $0xc0] sm:$0xff]
    %v164 = vld [vmem:[%s3 + $0xc8] sm:$0xff]
    %v165 = vld [vmem:[%s3 + $0xd0] sm:$0xff]
    %v166 = vld [vmem:[%s3 + $0xd8] sm:$0xff]
    %v167 = vld [vmem:[%s3 + $0xe0] sm:$0xff]
    %v168 = vld [vmem:[%s3 + $0xe8] sm:$0xff]
    %v169 = vld [vmem:[%s3 + $0xf0] sm:$0xff]
    %v170 = vld [vmem:[%s3 + $0xf8] sm:$0xff]
    %v171 = vld [vmem:[%s4] sm:$0x3]
    %v173 = vlaneseq
    %v174 = vshrl.u32 %v173, 7
    %v175 = vsub.s32 0, %v174
    %v176 = vrot.slane %v171, %v175
    %v177 = vlaneseq
    %v178 = vshrl.u32 %v177, 7
    %v179 = vsub.s32 1, %v178
    %v180 = vrot.slane %v171, %v179
    %183 = vmatprep.subr.mxu0 %v140
    %184 = vmatpush1.msra.mxu0 %v139
    %185 = vmatprep.subr.mxu0 %v142
    %186 = vmatpush1.msra.mxu0 %v141
    %187 = vmatprep.subr.mxu0 %v144
    %188 = vmatpush1.msra.mxu0 %v143
    %189 = vmatprep.subr.mxu0 %v146
    %190 = vmatpush1.msra.mxu0 %v145
    %191 = vmatprep.subr.mxu0 %v148
    %192 = vmatpush1.msra.mxu0 %v147
    %193 = vmatprep.subr.mxu0 %v150
    %194 = vmatpush1.msra.mxu0 %v149
    %195 = vmatprep.subr.mxu0 %v152
    %196 = vmatpush1.msra.mxu0 %v151
    %197 = vmatprep.subr.mxu0 %v154
    %198 = vmatpush1.msra.mxu0 %v153
    %199 = vmatprep.subr.mxu0 %v156
    %200 = vmatpush1.msra.mxu0 %v155
    %201 = vmatprep.subr.mxu0 %v158
    %202 = vmatpush1.msra.mxu0 %v157
    %203 = vmatprep.subr.mxu0 %v160
    %204 = vmatpush1.msra.mxu0 %v159
    %205 = vmatprep.subr.mxu0 %v162
    %206 = vmatpush1.msra.mxu0 %v161
    %207 = vmatprep.subr.mxu0 %v164
    %208 = vmatpush1.msra.mxu0 %v163
    %209 = vmatprep.subr.mxu0 %v166
    %210 = vmatpush1.msra.mxu0 %v165
    %211 = vmatprep.subr.mxu0 %v168
    %212 = vmatpush1.msra.mxu0 %v167
    %213 = vmatprep.subr.mxu0 %v170
    %214 = vmatpush1.msra.mxu0 %v169
    %215 = vmatprep.subr.mxu0 0.0
    %216 = vmatpush1.msra.mxu0 0.0
    %217 = vmatprep.subr.mxu0 0.0
    %218 = vmatpush1.msra.mxu0 0.0
    %219 = vmatprep.subr.mxu0 0.0
    %220 = vmatpush1.msra.mxu0 0.0
    %221 = vmatprep.subr.mxu0 0.0
    %222 = vmatpush1.msra.mxu0 0.0
    %223 = vmatprep.subr.mxu0 0.0
    %224 = vmatpush1.msra.mxu0 0.0
    %225 = vmatprep.subr.mxu0 0.0
    %226 = vmatpush1.msra.mxu0 0.0
    %227 = vmatprep.subr.mxu0 0.0
    %228 = vmatpush1.msra.mxu0 0.0
    %229 = vmatprep.subr.mxu0 0.0
    %230 = vmatpush1.msra.mxu0 0.0
    %231 = vmatprep.subr.mxu0 0.0
    %232 = vmatpush1.msra.mxu0 0.0
    %233 = vmatprep.subr.mxu0 0.0
    %234 = vmatpush1.msra.mxu0 0.0
    %235 = vmatprep.subr.mxu0 0.0
    %236 = vmatpush1.msra.mxu0 0.0
    %237 = vmatprep.subr.mxu0 0.0
    %238 = vmatpush1.msra.mxu0 0.0
    %239 = vmatprep.subr.mxu0 0.0
    %240 = vmatpush1.msra.mxu0 0.0
    %241 = vmatprep.subr.mxu0 0.0
    %242 = vmatpush1.msra.mxu0 0.0
    %243 = vmatprep.subr.mxu0 0.0
    %244 = vmatpush1.msra.mxu0 0.0
    %245 = vmatprep.subr.mxu0 0.0
    %246 = vmatpush1.msra.mxu0 0.0
    %247 = vmatprep.mubr.f32.mxu0 0.0
    %248 = vmatmul.mubr.f32.gmra.mrb[0].mxu0 %v138
    %v249 = vpop.f32.mrb[0].mxu0
    %v250 = vadd.f32 %v176, %v249
    %v251 = vpop.f32.mrb[0].mxu0
    %v252 = vadd.f32 %v180, %v251
    %253 = vdwg.mxu0
    %v254 = vxor.u32 %v250, 2147483648
    %v255 = vxor.u32 %v252, 2147483648
    %v256 = vmul.f32 %v254, 1.442695
    %v257 = vpow.pop %v256
    %v258 = vmul.f32 %v255, 1.442695
    %v259 = vpow.pop %v258
    %v260 = vadd.f32 %v257, 1.0
    %v261 = vadd.f32 %v259, 1.0
    %v262 = vrcp.pop %v260
    %v263 = vmul.f32 1.0, %v262
    %v264 = vrcp.pop %v261
    %v265 = vmul.f32 1.0, %v264
    %266 = vst [vmem:[#allocation2] sm:$0xff] %v263
    %267 = vst.msk [vmem:[#allocation2 + $0x8] sm:$0xff] %vm60, %v265
    // Predicated region
    $region22: #{dna_autoencoder_forward.1} parent=1 // pred_check
      _
    $region23: #{dna_autoencoder_forward.1} parent=1 // pred_check_branch
      %269 = sbr.rel (0) target = $region25
    $region24: #{dna_autoencoder_forward.1} parent=1 // pred_region
      %s271 = ssub.s32 256, 256
      %272 = vsyncadd [#allocation3], %s271
      %s274 = sshll.u32 [#allocation2], 4
      %s275 = int_to_ptr.vmem [resolvable:$true] %s274
      %277 = dma.vmem_to_hbm [thread:$0]  %s275, 256, %s5, [#allocation3]
    $region25: #{dna_autoencoder_forward.1} parent=1 // pred_fallthru
      _
    // Predicated region
    $region26: #{dna_autoencoder_forward.1} parent=1 // pred_check
      _
    $region27: #{dna_autoencoder_forward.1} parent=1 // pred_check_branch
      %279 = sbr.rel (0) target = $region29
    $region28: #{dna_autoencoder_forward.1} parent=1 // pred_region
      %280 = dma.done [#allocation3], 256
    $region29: #{dna_autoencoder_forward.1} parent=1 // pred_fallthru
      _
    %281 = vsyncpa [#allocation3], 1

</llo_original>
